<compile_context>
chip_gen: v5e
topology: v5e:2x2
jax: 0.10.0
libtpu: 0.0.40
codegen_flags: <defaults>
</compile_context>

<pallas_src>
import functools

import jax
import jax.numpy as jnp
import numpy as np
from jax import lax
from jax.experimental import pallas as pl
from jax.experimental.pallas import tpu as pltpu


def _round_up(x, m):
    return ((x + m - 1) // m) * m


# --------------------------------- kernel ------------------------------------

def gin_lspe_kernel(send_ref, rec_ref, hpm_ref, hp_ref,
                    w1_ref, b1_ref, w2_ref, b2_ref, out_ref,
                    *, half, split_epilogue, mxu_dtype):
    nb = pl.program_id(0)                 # node-block axis ("parallel")
    e = pl.program_id(1)                  # edge-tile axis ("arbitrary" reduction)
    n_e = pl.num_programs(1)
    TE = send_ref.shape[0]
    TN = out_ref.shape[0]
    N_pad = hpm_ref.shape[0]

    # out_ref doubles as the aggregation accumulator (resident across the edge axis).
    @pl.when(e == 0)
    def _():
        out_ref[...] = jnp.zeros_like(out_ref)

    # Gather: msgs[e] = hp[send[e]]  ==  S @ hp   (one 2*Hp-wide MXU pass).
    send = send_ref[...]                                               # (TE, 1) i32
    col_ids = lax.broadcasted_iota(jnp.int32, (TE, N_pad), 1)
    S = (col_ids == send).astype(mxu_dtype)                            # (TE, N_pad)
    msgs = jnp.dot(S, hpm_ref[...], preferred_element_type=mxu_dtype)  # (TE, 2Hp)

    # Scatter-add into this node block: one-hot built pre-transposed (no XLU transpose).
    rec_row = rec_ref[...]                                             # (1, TE) i32
    row_ids = lax.broadcasted_iota(jnp.int32, (TN, TE), 0) + nb * TN
    R_T = (row_ids == rec_row).astype(mxu_dtype)                       # (TN, TE)
    out_ref[...] += jnp.dot(R_T, msgs, preferred_element_type=jnp.float32)

    # Fused MLP epilogue (f32) on the last edge tile only.
    @pl.when(e == n_e - 1)
    def _():
        x = hp_ref[...] + out_ref[...]        # [h+agg_h | 0 | p+agg_p | 0]  (TN, 2Hp)
        if split_epilogue:
            # Hp % 128 == 0: skip the structural-zero blocks of the fused weights,
            # keeping both half-width stores lane-aligned.
            hid_h = jnp.maximum(
                jnp.dot(x, w1_ref[:, :half], preferred_element_type=jnp.float32)
                + b1_ref[:, :half], 0.0)
            hid_p = jnp.maximum(
                jnp.dot(x[:, half:], w1_ref[half:, half:],
                        preferred_element_type=jnp.float32)
                + b1_ref[:, half:], 0.0)
            out_ref[:, :half] = (
                jnp.dot(hid_h, w2_ref[:half, :half],
                        preferred_element_type=jnp.float32) + b2_ref[:, :half])
            out_ref[:, half:] = (
                jnp.dot(hid_p, w2_ref[half:, half:],
                        preferred_element_type=jnp.float32) + b2_ref[:, half:])
        else:
            hid = jnp.maximum(
                jnp.dot(x, w1_ref[...], preferred_element_type=jnp.float32)
                + b1_ref[...], 0.0)
            out_ref[...] = (
                jnp.dot(hid, w2_ref[...], preferred_element_type=jnp.float32)
                + b2_ref[...])


# --------------------------------- wrapper -----------------------------------

def gin_lspe_layer(h, p, edge_index, params, *, edge_tile=1024, node_tile=None,
                   mxu_dtype=jnp.bfloat16, vmem_limit_bytes=None):
    """GIN-LSPE forward. h, p: [N, H] f32; edge_index: [2, E] int.

    params: PyTorch-style weights stored transposed ([in, out]), see init_params.

    Tuning:
      * edge_tile is rounded up to a multiple of 128.  v5e/v6e (128 MiB VMEM):
        1024-2048 (pass a larger vmem_limit_bytes if the computed one is capped).
        v7x (64 MiB VMEM): keep <= 512 so the one-hot temporaries + resident hp fit.
      * node_tile defaults to ~N/2 (two blocks -> both v7x TensorCores via the
        "parallel" grid axis); must be a multiple of 8.
      * mxu_dtype=bf16 feeds the gather/scatter matmuls in bf16 (one-hot values are
        exact; f32 accumulation); use jnp.float32 for bit-accurate validation.
    """
    N, H = h.shape
    E = edge_index.shape[1]

    # Feature padding: Hp multiple of 64 so the packed slab width 2*Hp is a multiple
    # of 128 (lane-dense output, no masked partial stores).
    Hp = _round_up(H, 64)
    H2 = 2 * Hp

    # Edge tile multiple of 128 so the lane-dense (1, te) rec block satisfies the
    # (8, 128) BlockSpec constraint (also covers the bf16 te % 16 packing rule).
    te = max(128, _round_up(int(edge_tile), 128))
    E_pad = _round_up(max(E, 1), te)

    # Node tiling: default ~N/2 (two blocks), multiple of 8.
    if node_tile is None:
        node_tile = max(8, min(512, _round_up(-(-N // 2), 8)))
    TN = max(8, _round_up(int(node_tile), 8))
    N_pad = _round_up(N, TN)

    # Edge index blocks. Padded edges get node id N_pad -> never match any node id in
    # [0, N_pad) -> zero one-hot rows (dropped edges).
    pad_e = E_pad - E
    send = jnp.concatenate([edge_index[0].astype(jnp.int32),
                            jnp.full((pad_e,), N_pad, jnp.int32)]).reshape(E_pad, 1)
    rec = jnp.concatenate([edge_index[1].astype(jnp.int32),
                           jnp.full((pad_e,), N_pad, jnp.int32)]).reshape(1, E_pad)

    # Lane-dense packed features [h | 0 | p | 0], zero node-row padding.
    hp = jnp.zeros((N_pad, H2), jnp.float32)
    hp = hp.at[:N, :H].set(h.astype(jnp.float32))
    hp = hp.at[:N, Hp:Hp + H].set(p.astype(jnp.float32))
    hp_mxu = hp.astype(mxu_dtype)          # cast once here, not per grid step

    # Fuse / zero-pad the h- and p-branch MLP weights.
    w1h, b1h, w2h, b2h, w1p, b1p, w2p, b2p = params
    w1 = jnp.zeros((H2, H2), jnp.float32)
    w1 = w1.at[:H, :H].set(w1h[:H, :])             # h-branch, h-part of input
    w1 = w1.at[Hp:Hp + H, :H].set(w1h[H:, :])      # h-branch, p-part of input
    w1 = w1.at[Hp:Hp + H, Hp:Hp + H].set(w1p)      # p-branch
    b1 = jnp.zeros((1, H2), jnp.float32)
    b1 = b1.at[:, :H].set(b1h).at[:, Hp:Hp + H].set(b1p)
    w2 = jnp.zeros((H2, H2), jnp.float32)
    w2 = w2.at[:H, :H].set(w2h).at[Hp:Hp + H, Hp:Hp + H].set(w2p)
    b2 = jnp.zeros((1, H2), jnp.float32)
    b2 = b2.at[:, :H].set(b2h).at[:, Hp:Hp + H].set(b2p)

    n_nb = N_pad // TN
    n_e = E_pad // te
    split_epilogue = (Hp % 128 == 0)
    mxu_bytes = int(np.dtype(mxu_dtype).itemsize)

    # VMEM budget: double-buffered BlockSpec tiles + in-kernel transients + margin.
    def tile_bytes(rows, cols, item):
        sub = 16 if item == 2 else 8
        return _round_up(rows, sub) * _round_up(cols, 128) * item

    vmem_need = (
        2 * tile_bytes(te, 1, 4) + 2 * tile_bytes(1, te, 4)             # send, rec
        + 2 * tile_bytes(N_pad, H2, mxu_bytes)                          # hp (mxu dtype)
        + 2 * tile_bytes(TN, H2, 4)                                     # hp (f32 block)
        + 2 * (2 * tile_bytes(H2, H2, 4) + 2 * tile_bytes(1, H2, 4))    # w1, b1, w2, b2
        + 2 * tile_bytes(TN, H2, 4)                                     # out / accumulator
        + tile_bytes(te, N_pad, mxu_bytes)                              # S (transient)
        + tile_bytes(TN, te, mxu_bytes)                                 # R_T (transient)
        + tile_bytes(te, H2, mxu_bytes)                                 # msgs (transient)
        + 2 * tile_bytes(TN, H2, 4)                                     # x / hid
        + (2 << 20))
    if vmem_limit_bytes is None:
        vmem_limit_bytes = int(min(max(vmem_need, 16 << 20), 64 << 20))

    flops = n_nb * (n_e * (2 * te * N_pad * H2 + 2 * TN * te * H2)
                    + 2 * 2 * TN * H2 * H2)
    bytes_accessed = ((send.size + rec.size) * 4 + hp.size * 4
                      + hp_mxu.size * mxu_bytes
                      + (w1.size + b1.size + w2.size + b2.size) * 4
                      + N_pad * H2 * 4)
    cost = pl.CostEstimate(flops=int(flops), transcendentals=0,
                           bytes_accessed=int(bytes_accessed))

    kernel = functools.partial(gin_lspe_kernel, half=Hp,
                               split_epilogue=split_epilogue, mxu_dtype=mxu_dtype)

    out = pl.pallas_call(
        kernel,
        out_shape=jax.ShapeDtypeStruct((N_pad, H2), jnp.float32),
        grid_spec=pltpu.PrefetchScalarGridSpec(
            num_scalar_prefetch=0,
            grid=(n_nb, n_e),
            in_specs=[
                pl.BlockSpec((te, 1), lambda nb, e: (e, 0)),        # send
                pl.BlockSpec((1, te), lambda nb, e: (0, e)),        # rec (lane-dense)
                pl.BlockSpec((N_pad, H2), lambda nb, e: (0, 0)),    # hp (mxu dtype)
                pl.BlockSpec((TN, H2), lambda nb, e: (nb, 0)),      # hp (f32 node blk)
                pl.BlockSpec((H2, H2), lambda nb, e: (0, 0)),       # w1
                pl.BlockSpec((1, H2), lambda nb, e: (0, 0)),        # b1
                pl.BlockSpec((H2, H2), lambda nb, e: (0, 0)),       # w2
                pl.BlockSpec((1, H2), lambda nb, e: (0, 0)),        # b2
            ],
            out_specs=pl.BlockSpec((TN, H2), lambda nb, e: (nb, 0)),
        ),
        compiler_params=pltpu.CompilerParams(
            dimension_semantics=("parallel", "arbitrary"),
            vmem_limit_bytes=vmem_limit_bytes),
        cost_estimate=cost,
    )(send, rec, hp_mxu, hp, w1, b1, w2, b2)

    return out[:N, :H], out[:N, Hp:Hp + H]


# ----------------------- parameter init (deterministic) -----------------------

def init_linear(key, in_f, out_f):
    """PyTorch nn.Linear default init; weight stored as [in, out] (transposed)."""
    k_w, k_b = jax.random.split(key)
    bound = 1.0 / jnp.sqrt(jnp.float32(in_f))
    w = jax.random.uniform(k_w, (in_f, out_f), jnp.float32, -bound, bound)
    b = jax.random.uniform(k_b, (1, out_f), jnp.float32, -bound, bound)
    return w, b


def init_params(key, num_hidden):
    keys = jax.random.split(key, 4)
    w1h, b1h = init_linear(keys[0], 2 * num_hidden, num_hidden)
    w2h, b2h = init_linear(keys[1], num_hidden, num_hidden)
    w1p, b1p = init_linear(keys[2], num_hidden, num_hidden)
    w2p, b2p = init_linear(keys[3], num_hidden, num_hidden)
    return (w1h, b1h, w2h, b2h, w1p, b1p, w2p, b2p)


# ----------------------------- pure-JAX reference -----------------------------

def ref_forward(h, p, edge_index, params):
    w1h, b1h, w2h, b2h, w1p, b1p, w2p, b2p = params
    send, rec = edge_index[0], edge_index[1]
    N = h.shape[0]

    h_messages = jnp.concatenate([h[send], p[send]], axis=1)
    h_agg = jnp.zeros((N, h_messages.shape[1]), jnp.float32).at[rec].add(h_messages)
    h_in = jnp.concatenate([h, p], axis=1) + h_agg
    h_out = jnp.maximum(h_in @ w1h + b1h, 0.0) @ w2h + b2h

    p_agg = jnp.zeros_like(p).at[rec].add(p[send])
    p_in = p + p_agg
    p_out = jnp.maximum(p_in @ w1p + b1p, 0.0) @ w2p + b2p
    return h_out, p_out


if __name__ == "__main__":
    key = jax.random.PRNGKey(0)
    k_h, k_p, k_s, k_r, k_param, k_h3, k_p3, k_param3 = jax.random.split(key, 8)

    # Small graph: 16 nodes, hidden 32, 200 edges (exercises multi-tile reduction).
    N, H, E = 16, 32, 200
    h = jax.random.normal(k_h, (N, H), jnp.float32)
    p = jax.random.normal(k_p, (N, H), jnp.float32)
    send = jax.random.randint(k_s, (E,), 0, N, jnp.int32)
    rec = jax.random.randint(k_r, (E,), 0, N, jnp.int32)
    edge_index = jnp.stack([send, rec], axis=0)     # [2, E]

    params = init_params(k_param, H)
    h_ref, p_ref = ref_forward(h, p, edge_index, params)

    # 1) exact f32 MXU path; grid = (2 node blocks, 2 edge tiles).
    h_out, p_out = gin_lspe_layer(h, p, edge_index, params,
                                  edge_tile=128, node_tile=8,
                                  mxu_dtype=jnp.float32)
    jax.block_until_ready((h_out, p_out))
    assert jnp.allclose(h_out, h_ref, atol=1e-4, rtol=1e-4), "h mismatch (f32)"
    assert jnp.allclose(p_out, p_ref, atol=1e-4, rtol=1e-4), "p mismatch (f32)"

    # 2) default path: bf16 MXU feed, default tiles (node axis still parallel).
    h_bf, p_bf = gin_lspe_layer(h, p, edge_index, params)
    jax.block_until_ready((h_bf, p_bf))
    assert jnp.allclose(h_bf, h_ref, atol=1e-1, rtol=1e-1), "h mismatch (bf16)"
    assert jnp.allclose(p_bf, p_ref, atol=1e-1, rtol=1e-1), "p mismatch (bf16)"

    # 3) H = 128 (Hp % 128 == 0): exercises the split (zero-block-skipping) epilogue.
    H3 = 128
    h3 = jax.random.normal(k_h3, (N, H3), jnp.float32)
    p3 = jax.random.normal(k_p3, (N, H3), jnp.float32)
    params3 = init_params(k_param3, H3)
    h3_ref, p3_ref = ref_forward(h3, p3, edge_index, params3)
    h3_out, p3_out = gin_lspe_layer(h3, p3, edge_index, params3,
                                    edge_tile=256, node_tile=8,
                                    mxu_dtype=jnp.float32)
    jax.block_until_ready((h3_out, p3_out))
    assert jnp.allclose(h3_out, h3_ref, atol=1e-3, rtol=1e-3), "h mismatch (split)"
    assert jnp.allclose(p3_out, p3_ref, atol=1e-3, rtol=1e-3), "p mismatch (split)"

    print("KERNEL_OK")
</pallas_src>

<mosaic_0001>
module attributes {stable_mosaic.version = 11 : i64} {
  func.func @gin_lspe_kernel(%arg0: i32, %arg1: i32, %arg2: memref<128x1xi32, #tpu.memory_space<vmem>>, %arg3: memref<1x128xi32, #tpu.memory_space<vmem>>, %arg4: memref<16x128xf32, #tpu.memory_space<vmem>>, %arg5: memref<8x128xf32, #tpu.memory_space<vmem>>, %arg6: memref<128x128xf32, #tpu.memory_space<vmem>>, %arg7: memref<1x128xf32, #tpu.memory_space<vmem>>, %arg8: memref<128x128xf32, #tpu.memory_space<vmem>>, %arg9: memref<1x128xf32, #tpu.memory_space<vmem>>, %arg10: memref<8x128xf32, #tpu.memory_space<vmem>>) attributes {dimension_semantics = [#tpu.dimension_semantics<parallel>, #tpu.dimension_semantics<arbitrary>], iteration_bounds = array<i64: 2, 2>, scalar_prefetch = 0 : i64, scratch_operands = 0 : i64, tpu.core_type = #tpu.core_type<tc>, window_params = [{transform_indices = @transform_0, window_bounds = array<i64: 128, 1>}, {transform_indices = @transform_1, window_bounds = array<i64: 1, 128>}, {pipeline_mode = #tpu.pipeline_mode<synchronous>, transform_indices = @transform_2, window_bounds = array<i64: 16, 128>}, {transform_indices = @transform_3, window_bounds = array<i64: 8, 128>}, {pipeline_mode = #tpu.pipeline_mode<synchronous>, transform_indices = @transform_4, window_bounds = array<i64: 128, 128>}, {pipeline_mode = #tpu.pipeline_mode<synchronous>, transform_indices = @transform_5, window_bounds = array<i64: 1, 128>}, {pipeline_mode = #tpu.pipeline_mode<synchronous>, transform_indices = @transform_6, window_bounds = array<i64: 128, 128>}, {pipeline_mode = #tpu.pipeline_mode<synchronous>, transform_indices = @transform_7, window_bounds = array<i64: 1, 128>}, {transform_indices = @transform_8, window_bounds = array<i64: 8, 128>}]} {
    %c0_i32 = arith.constant 0 : i32
    %0 = arith.cmpi eq, %arg1, %c0_i32 : i32
    %1 = arith.extui %0 : i1 to i32
    %c0_i32_0 = arith.constant 0 : i32
    %2 = arith.cmpi ne, %1, %c0_i32_0 : i32
    scf.if %2 {
      %cst_12 = arith.constant 0.000000e+00 : f32
      %27 = vector.broadcast %cst_12 : f32 to vector<8x128xf32>
      %c0_13 = arith.constant 0 : index
      %c0_14 = arith.constant 0 : index
      %28 = vector.load %arg10[%c0_13, %c0_14] : memref<8x128xf32, #tpu.memory_space<vmem>>, vector<8x128xf32>
      tpu.vector_store %arg10[%c0_13, %c0_14], %27 {strides = array<i32>} : memref<8x128xf32, #tpu.memory_space<vmem>>, vector<8x128xf32>,
    } else {
    }
    %c0 = arith.constant 0 : index
    %c0_1 = arith.constant 0 : index
    %3 = vector.load %arg2[%c0, %c0_1] : memref<128x1xi32, #tpu.memory_space<vmem>>, vector<128x1xi32>
    %4 = tpu.iota {dimensions = array<i32: 1>} : vector<128x16xi32>
    %5 = vector.broadcast %3 : vector<128x1xi32> to vector<128x16xi32>
    %6 = arith.cmpi eq, %4, %5 : vector<128x16xi32>
    %7 = arith.extui %6 : vector<128x16xi1> to vector<128x16xi32>
    %8 = arith.sitofp %7 : vector<128x16xi32> to vector<128x16xf32>
    %c0_2 = arith.constant 0 : index
    %c0_3 = arith.constant 0 : index
    %9 = vector.load %arg4[%c0_2, %c0_3] : memref<16x128xf32, #tpu.memory_space<vmem>>, vector<16x128xf32>
    %cst = arith.constant dense<0.000000e+00> : vector<128x128xf32>
    %10 = tpu.matmul %8, %9, %cst {dimension_numbers = #tpu.dot_dimension_numbers<[1], [0], [0], [1], [0, 0, 1, 1], [], []>} : vector<128x16xf32>, vector<16x128xf32>, vector<128x128xf32> -> vector<128x128xf32>
    %c0_4 = arith.constant 0 : index
    %c0_5 = arith.constant 0 : index
    %11 = vector.load %arg3[%c0_4, %c0_5] : memref<1x128xi32, #tpu.memory_space<vmem>>, vector<1x128xi32>
    %12 = tpu.iota {dimensions = array<i32: 0>} : vector<8x128xi32>
    %c8_i32 = arith.constant 8 : i32
    %13 = arith.muli %arg0, %c8_i32 : i32
    %14 = vector.broadcast %13 : i32 to vector<8x128xi32>
    %15 = arith.addi %12, %14 : vector<8x128xi32>
    %16 = vector.broadcast %11 : vector<1x128xi32> to vector<8x128xi32>
    %17 = arith.cmpi eq, %15, %16 : vector<8x128xi32>
    %18 = arith.extui %17 : vector<8x128xi1> to vector<8x128xi32>
    %19 = arith.sitofp %18 : vector<8x128xi32> to vector<8x128xf32>
    %c0_6 = arith.constant 0 : index
    %c0_7 = arith.constant 0 : index
    %20 = vector.load %arg10[%c0_6, %c0_7] : memref<8x128xf32, #tpu.memory_space<vmem>>, vector<8x128xf32>
    %cst_8 = arith.constant dense<0.000000e+00> : vector<8x128xf32>
    %21 = tpu.matmul %19, %10, %cst_8 {dimension_numbers = #tpu.dot_dimension_numbers<[1], [0], [0], [1], [0, 0, 1, 1], [], []>} : vector<8x128xf32>, vector<128x128xf32>, vector<8x128xf32> -> vector<8x128xf32>
    %22 = arith.addf %20, %21 : vector<8x128xf32>
    %c0_9 = arith.constant 0 : index
    %c0_10 = arith.constant 0 : index
    %23 = vector.load %arg10[%c0_9, %c0_10] : memref<8x128xf32, #tpu.memory_space<vmem>>, vector<8x128xf32>
    tpu.vector_store %arg10[%c0_9, %c0_10], %22 {strides = array<i32>} : memref<8x128xf32, #tpu.memory_space<vmem>>, vector<8x128xf32>,
    %c1_i32 = arith.constant 1 : i32
    %24 = arith.cmpi eq, %arg1, %c1_i32 : i32
    %25 = arith.extui %24 : i1 to i32
    %c0_i32_11 = arith.constant 0 : i32
    %26 = arith.cmpi ne, %25, %c0_i32_11 : i32
    scf.if %26 {
      %c0_12 = arith.constant 0 : index
      %c0_13 = arith.constant 0 : index
      %27 = vector.load %arg5[%c0_12, %c0_13] : memref<8x128xf32, #tpu.memory_space<vmem>>, vector<8x128xf32>
      %c0_14 = arith.constant 0 : index
      %c0_15 = arith.constant 0 : index
      %28 = vector.load %arg10[%c0_14, %c0_15] : memref<8x128xf32, #tpu.memory_space<vmem>>, vector<8x128xf32>
      %29 = arith.addf %27, %28 : vector<8x128xf32>
      %c0_16 = arith.constant 0 : index
      %c0_17 = arith.constant 0 : index
      %30 = vector.load %arg6[%c0_16, %c0_17] : memref<128x128xf32, #tpu.memory_space<vmem>>, vector<128x128xf32>
      %cst_18 = arith.constant dense<0.000000e+00> : vector<8x128xf32>
      %31 = tpu.matmul %29, %30, %cst_18 {dimension_numbers = #tpu.dot_dimension_numbers<[1], [0], [0], [1], [0, 0, 1, 1], [], []>} : vector<8x128xf32>, vector<128x128xf32>, vector<8x128xf32> -> vector<8x128xf32>
      %c0_19 = arith.constant 0 : index
      %c0_20 = arith.constant 0 : index
      %32 = vector.load %arg7[%c0_19, %c0_20] : memref<1x128xf32, #tpu.memory_space<vmem>>, vector<1x128xf32>
      %33 = vector.broadcast %32 : vector<1x128xf32> to vector<8x128xf32>
      %34 = arith.addf %31, %33 : vector<8x128xf32>
      %cst_21 = arith.constant 0.000000e+00 : f32
      %35 = vector.broadcast %cst_21 : f32 to vector<8x128xf32>
      %36 = arith.maximumf %34, %35 : vector<8x128xf32>
      %c0_22 = arith.constant 0 : index
      %c0_23 = arith.constant 0 : index
      %37 = vector.load %arg8[%c0_22, %c0_23] : memref<128x128xf32, #tpu.memory_space<vmem>>, vector<128x128xf32>
      %cst_24 = arith.constant dense<0.000000e+00> : vector<8x128xf32>
      %38 = tpu.matmul %36, %37, %cst_24 {dimension_numbers = #tpu.dot_dimension_numbers<[1], [0], [0], [1], [0, 0, 1, 1], [], []>} : vector<8x128xf32>, vector<128x128xf32>, vector<8x128xf32> -> vector<8x128xf32>
      %c0_25 = arith.constant 0 : index
      %c0_26 = arith.constant 0 : index
      %39 = vector.load %arg9[%c0_25, %c0_26] : memref<1x128xf32, #tpu.memory_space<vmem>>, vector<1x128xf32>
      %40 = vector.broadcast %39 : vector<1x128xf32> to vector<8x128xf32>
      %41 = arith.addf %38, %40 : vector<8x128xf32>
      %c0_27 = arith.constant 0 : index
      %c0_28 = arith.constant 0 : index
      %42 = vector.load %arg10[%c0_27, %c0_28] : memref<8x128xf32, #tpu.memory_space<vmem>>, vector<8x128xf32>
      tpu.vector_store %arg10[%c0_27, %c0_28], %41 {strides = array<i32>} : memref<8x128xf32, #tpu.memory_space<vmem>>, vector<8x128xf32>,
    } else {
    }
    return
  }
  func.func @transform_0(%arg0: i32, %arg1: i32) -> (i32, i32) {
    %c0_i32 = arith.constant 0 : i32
    %c0_i32_0 = arith.constant 0 : i32
    return %arg1, %c0_i32 : i32, i32
  }
  func.func @transform_1(%arg0: i32, %arg1: i32) -> (i32, i32) {
    %c0_i32 = arith.constant 0 : i32
    %c0_i32_0 = arith.constant 0 : i32
    return %c0_i32, %arg1 : i32, i32
  }
  func.func @transform_2(%arg0: i32, %arg1: i32) -> (i32, i32) {
    %c0_i32 = arith.constant 0 : i32
    %c0_i32_0 = arith.constant 0 : i32
    %c0_i32_1 = arith.constant 0 : i32
    return %c0_i32, %c0_i32_0 : i32, i32
  }
  func.func @transform_3(%arg0: i32, %arg1: i32) -> (i32, i32) {
    %c0_i32 = arith.constant 0 : i32
    %c0_i32_0 = arith.constant 0 : i32
    return %arg0, %c0_i32 : i32, i32
  }
  func.func @transform_4(%arg0: i32, %arg1: i32) -> (i32, i32) {
    %c0_i32 = arith.constant 0 : i32
    %c0_i32_0 = arith.constant 0 : i32
    %c0_i32_1 = arith.constant 0 : i32
    return %c0_i32, %c0_i32_0 : i32, i32
  }
  func.func @transform_5(%arg0: i32, %arg1: i32) -> (i32, i32) {
    %c0_i32 = arith.constant 0 : i32
    %c0_i32_0 = arith.constant 0 : i32
    %c0_i32_1 = arith.constant 0 : i32
    return %c0_i32, %c0_i32_0 : i32, i32
  }
  func.func @transform_6(%arg0: i32, %arg1: i32) -> (i32, i32) {
    %c0_i32 = arith.constant 0 : i32
    %c0_i32_0 = arith.constant 0 : i32
    %c0_i32_1 = arith.constant 0 : i32
    return %c0_i32, %c0_i32_0 : i32, i32
  }
  func.func @transform_7(%arg0: i32, %arg1: i32) -> (i32, i32) {
    %c0_i32 = arith.constant 0 : i32
    %c0_i32_0 = arith.constant 0 : i32
    %c0_i32_1 = arith.constant 0 : i32
    return %c0_i32, %c0_i32_0 : i32, i32
  }
  func.func @transform_8(%arg0: i32, %arg1: i32) -> (i32, i32) {
    %c0_i32 = arith.constant 0 : i32
    %c0_i32_0 = arith.constant 0 : i32
    return %arg0, %c0_i32 : i32, i32
  }
}

</mosaic_0001>

<llo_original>
// kernel: tpu_custom_call.1
$region0: #{tpu_custom_call.1}
  #allocation0 [shape = 'u32[]', space=smem, size = 0x4, offset = 0x4, fixed_abs, tag = 'smem constant byte address 0x4 - core index']
  #allocation1 [shape = 'u32[72,128]{1,0:T(1,128)}', space=vmem, size = 0x9000, scoped, tag = 'internal scratch']
  %s0 = inlined_call_operand.vmem [shape: s32[256,1], index: 0, kind: input, shape index: {}]
  %s1 = inlined_call_operand.vmem [shape: s32[1,256], index: 1, kind: input, shape index: {}]
  %s2 = inlined_call_operand.hbm [shape: f32[16,128], index: 2, kind: input, shape index: {}]
  %s3 = inlined_call_operand.hbm [shape: f32[16,128], index: 3, kind: input, shape index: {}]
  %s4 = inlined_call_operand.vmem [shape: f32[128,128], index: 4, kind: input, shape index: {}]
  %s5 = inlined_call_operand.vmem [shape: f32[1,128], index: 5, kind: input, shape index: {}]
  %s6 = inlined_call_operand.vmem [shape: f32[128,128], index: 6, kind: input, shape index: {}]
  %s7 = inlined_call_operand.vmem [shape: f32[1,128], index: 7, kind: input, shape index: {}]
  %s8 = inlined_call_operand.hbm [shape: f32[16,128], index: 8, kind: output, shape index: {}]
  %s9 = sld [smem:[#allocation0]]
  $region81: #{tpu_custom_call.1} parent=0
    _
  %s11 = ssub.s32 1, %s9
  %s12 = scalar_select 0, %s11, %s9
  $region1: #{tpu_custom_call.1} parent=0
    #allocation2 [shape = 'u8[8192]{0}', space=vmem, size = 0x2000, scoped, tag = 'input window, operand 2, single buffered']
    #allocation3 [shape = 's32[2]{0}', space=sflag, size = 0x8, scoped, tag = 'scoped memory for tpu_custom_call.1']
    #allocation4 [shape = 's32[2]{0}', space=sflag, size = 0x8, scoped, tag = 'scoped memory for tpu_custom_call.1']
    #allocation5 [shape = 'u8[8192]{0}', space=vmem, size = 0x2000, scoped, tag = 'input window, operand 3']
    #allocation6 [shape = 's32[2]{0}', space=sflag, size = 0x8, scoped, tag = 'scoped memory for tpu_custom_call.1']
    #allocation7 [shape = 'u8[8192]{0}', space=vmem, size = 0x2000, scoped, tag = 'output window, operand 0']
    %13 = vsyncpa [#allocation3], 0
    %14 = vsyncpa [#allocation6], 0
    %s15 = scalar_lea.sflag [#allocation6], 1
    %16 = vsyncpa %s15, 0
    %17 = vsyncpa [#allocation4], 0
    %s18 = scalar_lea.sflag [#allocation4], 1
    %19 = vsyncpa %s18, 0
    loop: start=0, step=1, limit=6
    $region2: #{tpu_custom_call.1} parent=1 // loop_pre_header
      _
    $region3: #{tpu_custom_call.1} parent=1 // loop_header
      %s21 = sphi 0, %s25
      %p22 = scmp.ge.s32.totalorder %s21, 6
      %s28 = sphi 0, %s40
      %s29 = sphi 0, %s36
      %s30 = sphi 0, %s28
      %s31 = sphi 0, %s29
      %s32 = sphi 0, %s30
      %s33 = sphi 0, %s31
      %s43 = sphi 0, %s45
      %s46 = sphi 0, %s43
      %s47 = sphi 0, %s46
      %s63 = sphi 0, %s47
      %s69 = sphi 0, %s71
      %s72 = sphi 0, %s69
      %s73 = sphi 0, %s72
      %s89 = sphi 0, %s73
      %s93 = sphi 0, %s93
      %s95 = sphi 0, %s93
      %s96 = sphi 0, %s95
      %s110 = sphi 0, %s96
      %s116 = sphi 0, %s118
      %s119 = sphi 0, %s116
      %s120 = sphi 0, %s119
      %s136 = sphi 0, %s120
      %s140 = sphi 0, %s140
      %s142 = sphi 0, %s140
      %s143 = sphi 0, %s142
      %s157 = sphi 0, %s143
      %s161 = sphi 0, %s161
      %s163 = sphi 0, %s161
      %s164 = sphi 0, %s163
      %s178 = sphi 0, %s164
      %s182 = sphi 0, %s182
      %s184 = sphi 0, %s182
      %s185 = sphi 0, %s184
      %s199 = sphi 0, %s185
      %s203 = sphi 0, %s203
      %s205 = sphi 0, %s203
      %s206 = sphi 0, %s205
      %s220 = sphi 0, %s206
      %s226 = sphi 0, %s228
      %s229 = sphi 0, %s226
      %s230 = sphi 0, %s229
      %s246 = sphi 0, %s230
    $region4: #{tpu_custom_call.1} parent=1 // loop_header_branch
      %24 = sbr.rel (%p22) target = $region8
    $region5: #{tpu_custom_call.1} parent=1 // loop_body
      %s26 = ssub.s32 %s21, 1
      %s27 = ssub.s32 %s21, 2
      %s34 = sadd.s32 1, %s29
      %p35 = scmp.ge.s32.totalorder %s34, 2
      %s36 = scalar_select %p35, 0, %s34
      %s37 = sadd.s32 1, %s28
      %s38 = scalar_select %p35, %s37, %s28
      %p39 = scmp.ge.s32.totalorder %s38, 2
      %s40 = scalar_select %p39, 0, %s38
      %s41 = ssub.s32 %s29, %s36
      %p42 = scmp.eq.s32.totalorder %s41, 0
      %s44 = sadd.s32 %s43, 1
      %s45 = scalar_select %p42, %s43, %s44
      %p48 = pneg %p42
      %p49 = scmp.eq.s32.totalorder %s21, 3
      %p50 = por %p48, %p49
      %p51 = scmp.ne.s32.totalorder %s43, %s46
      %p52 = scmp.eq.s32.totalorder %s21, 0
      %p53 = por %p51, %p52
      %p54 = scmp.ne.s32.totalorder %s43, %s46
      %p55 = scmp.eq.s32.totalorder %s26, 3
      %p56 = por %p54, %p55
      %p57 = scmp.ne.s32.totalorder %s46, %s47
      %p58 = scmp.eq.s32.totalorder %s26, 0
      %p59 = por %p57, %p58
      %p60 = scmp.ne.s32.totalorder %s46, %s47
      %p61 = scmp.eq.s32.totalorder %s27, 3
      %p62 = por %p60, %p61
      %p64 = scmp.ne.s32.totalorder %s47, %s63
      %p65 = scmp.eq.s32.totalorder %s27, 0
      %p66 = por %p64, %p65
      %s67 = ssub.s32 %s29, %s36
      %p68 = scmp.eq.s32.totalorder %s67, 0
      %s70 = sadd.s32 %s69, 1
      %s71 = scalar_select %p68, %s69, %s70
      %p74 = pneg %p68
      %p75 = scmp.eq.s32.totalorder %s21, 3
      %p76 = por %p74, %p75
      %p77 = scmp.ne.s32.totalorder %s69, %s72
      %p78 = scmp.eq.s32.totalorder %s21, 0
      %p79 = por %p77, %p78
      %p80 = scmp.ne.s32.totalorder %s69, %s72
      %p81 = scmp.eq.s32.totalorder %s26, 3
      %p82 = por %p80, %p81
      %p83 = scmp.ne.s32.totalorder %s72, %s73
      %p84 = scmp.eq.s32.totalorder %s26, 0
      %p85 = por %p83, %p84
      %p86 = scmp.ne.s32.totalorder %s72, %s73
      %p87 = scmp.eq.s32.totalorder %s27, 3
      %p88 = por %p86, %p87
      %p90 = scmp.ne.s32.totalorder %s73, %s89
      %p91 = scmp.eq.s32.totalorder %s27, 0
      %p92 = por %p90, %p91
      %s94 = sadd.s32 %s93, 1
      %p97 = scmp.eq.s32.totalorder %s21, 3
      %p98 = scmp.ne.s32.totalorder %s93, %s95
      %p99 = scmp.eq.s32.totalorder %s21, 0
      %p100 = por %p98, %p99
      %p101 = scmp.ne.s32.totalorder %s93, %s95
      %p102 = scmp.eq.s32.totalorder %s26, 3
      %p103 = por %p101, %p102
      %p104 = scmp.ne.s32.totalorder %s95, %s96
      %p105 = scmp.eq.s32.totalorder %s26, 0
      %p106 = por %p104, %p105
      %p107 = scmp.ne.s32.totalorder %s95, %s96
      %p108 = scmp.eq.s32.totalorder %s27, 3
      %p109 = por %p107, %p108
      %p111 = scmp.ne.s32.totalorder %s96, %s110
      %p112 = scmp.eq.s32.totalorder %s27, 0
      %p113 = por %p111, %p112
      %s114 = ssub.s32 %s28, %s40
      %p115 = scmp.eq.s32.totalorder %s114, 0
      %s117 = sadd.s32 %s116, 1
      %s118 = scalar_select %p115, %s116, %s117
      %p121 = pneg %p115
      %p122 = scmp.eq.s32.totalorder %s21, 3
      %p123 = por %p121, %p122
      %p124 = scmp.ne.s32.totalorder %s116, %s119
      %p125 = scmp.eq.s32.totalorder %s21, 0
      %p126 = por %p124, %p125
      %p127 = scmp.ne.s32.totalorder %s116, %s119
      %p128 = scmp.eq.s32.totalorder %s26, 3
      %p129 = por %p127, %p128
      %p130 = scmp.ne.s32.totalorder %s119, %s120
      %p131 = scmp.eq.s32.totalorder %s26, 0
      %p132 = por %p130, %p131
      %p133 = scmp.ne.s32.totalorder %s119, %s120
      %p134 = scmp.eq.s32.totalorder %s27, 3
      %p135 = por %p133, %p134
      %p137 = scmp.ne.s32.totalorder %s120, %s136
      %p138 = scmp.eq.s32.totalorder %s27, 0
      %p139 = por %p137, %p138
      %s141 = sadd.s32 %s140, 1
      %p144 = scmp.eq.s32.totalorder %s21, 3
      %p145 = scmp.ne.s32.totalorder %s140, %s142
      %p146 = scmp.eq.s32.totalorder %s21, 0
      %p147 = por %p145, %p146
      %p148 = scmp.ne.s32.totalorder %s140, %s142
      %p149 = scmp.eq.s32.totalorder %s26, 3
      %p150 = por %p148, %p149
      %p151 = scmp.ne.s32.totalorder %s142, %s143
      %p152 = scmp.eq.s32.totalorder %s26, 0
      %p153 = por %p151, %p152
      %p154 = scmp.ne.s32.totalorder %s142, %s143
      %p155 = scmp.eq.s32.totalorder %s27, 3
      %p156 = por %p154, %p155
      %p158 = scmp.ne.s32.totalorder %s143, %s157
      %p159 = scmp.eq.s32.totalorder %s27, 0
      %p160 = por %p158, %p159
      %s162 = sadd.s32 %s161, 1
      %p165 = scmp.eq.s32.totalorder %s21, 3
      %p166 = scmp.ne.s32.totalorder %s161, %s163
      %p167 = scmp.eq.s32.totalorder %s21, 0
      %p168 = por %p166, %p167
      %p169 = scmp.ne.s32.totalorder %s161, %s163
      %p170 = scmp.eq.s32.totalorder %s26, 3
      %p171 = por %p169, %p170
      %p172 = scmp.ne.s32.totalorder %s163, %s164
      %p173 = scmp.eq.s32.totalorder %s26, 0
      %p174 = por %p172, %p173
      %p175 = scmp.ne.s32.totalorder %s163, %s164
      %p176 = scmp.eq.s32.totalorder %s27, 3
      %p177 = por %p175, %p176
      %p179 = scmp.ne.s32.totalorder %s164, %s178
      %p180 = scmp.eq.s32.totalorder %s27, 0
      %p181 = por %p179, %p180
      %s183 = sadd.s32 %s182, 1
      %p186 = scmp.eq.s32.totalorder %s21, 3
      %p187 = scmp.ne.s32.totalorder %s182, %s184
      %p188 = scmp.eq.s32.totalorder %s21, 0
      %p189 = por %p187, %p188
      %p190 = scmp.ne.s32.totalorder %s182, %s184
      %p191 = scmp.eq.s32.totalorder %s26, 3
      %p192 = por %p190, %p191
      %p193 = scmp.ne.s32.totalorder %s184, %s185
      %p194 = scmp.eq.s32.totalorder %s26, 0
      %p195 = por %p193, %p194
      %p196 = scmp.ne.s32.totalorder %s184, %s185
      %p197 = scmp.eq.s32.totalorder %s27, 3
      %p198 = por %p196, %p197
      %p200 = scmp.ne.s32.totalorder %s185, %s199
      %p201 = scmp.eq.s32.totalorder %s27, 0
      %p202 = por %p200, %p201
      %s204 = sadd.s32 %s203, 1
      %p207 = scmp.eq.s32.totalorder %s21, 3
      %p208 = scmp.ne.s32.totalorder %s203, %s205
      %p209 = scmp.eq.s32.totalorder %s21, 0
      %p210 = por %p208, %p209
      %p211 = scmp.ne.s32.totalorder %s203, %s205
      %p212 = scmp.eq.s32.totalorder %s26, 3
      %p213 = por %p211, %p212
      %p214 = scmp.ne.s32.totalorder %s205, %s206
      %p215 = scmp.eq.s32.totalorder %s26, 0
      %p216 = por %p214, %p215
      %p217 = scmp.ne.s32.totalorder %s205, %s206
      %p218 = scmp.eq.s32.totalorder %s27, 3
      %p219 = por %p217, %p218
      %p221 = scmp.ne.s32.totalorder %s206, %s220
      %p222 = scmp.eq.s32.totalorder %s27, 0
      %p223 = por %p221, %p222
      %s224 = ssub.s32 %s28, %s40
      %p225 = scmp.eq.s32.totalorder %s224, 0
      %s227 = sadd.s32 %s226, 1
      %s228 = scalar_select %p225, %s226, %s227
      %p231 = pneg %p225
      %p232 = scmp.eq.s32.totalorder %s21, 3
      %p233 = por %p231, %p232
      %p234 = scmp.ne.s32.totalorder %s226, %s229
      %p235 = scmp.eq.s32.totalorder %s21, 0
      %p236 = por %p234, %p235
      %p237 = scmp.ne.s32.totalorder %s226, %s229
      %p238 = scmp.eq.s32.totalorder %s26, 3
      %p239 = por %p237, %p238
      %p240 = scmp.ne.s32.totalorder %s229, %s230
      %p241 = scmp.eq.s32.totalorder %s26, 0
      %p242 = por %p240, %p241
      %p243 = scmp.ne.s32.totalorder %s229, %s230
      %p244 = scmp.eq.s32.totalorder %s27, 3
      %p245 = por %p243, %p244
      %p247 = scmp.ne.s32.totalorder %s230, %s246
      %p248 = scmp.eq.s32.totalorder %s27, 0
      %p249 = por %p247, %p248
      %p250 = scmp.le.s32.totalorder 1, %s21
      %p251 = scmp.lt.s32.totalorder %s21, 5
      %p252 = pnand %p250, %p251
      %p253 = pneg %p252
      // Predicated region
      $region9: #{tpu_custom_call.1} parent=5 // pred_check
        _
      $region10: #{tpu_custom_call.1} parent=5 // pred_check_branch
        %255 = sbr.rel (%p252) target = $region12
      $region11: #{tpu_custom_call.1} parent=5 // pred_region
        %s256 = ssub.s32 %s21, 1
        // Predicated region
        $region13: #{tpu_custom_call.1} parent=11 // pred_check
          %p257 = pneg %p106
        $region14: #{tpu_custom_call.1} parent=11 // pred_check_branch
          %259 = sbr.rel (%p257) target = $region16
        $region15: #{tpu_custom_call.1} parent=11 // pred_region
          %261 = vsyncadd [#allocation3], 0
          %s262 = sshll.u32 %s2, 4
          %s263 = int_to_ptr.hbm [resolvable:$true] %s262
          %s264 = sshll.u32 [#allocation2], 4
          %s265 = int_to_ptr.vmem [resolvable:$true] %s264
          %270 = dma.hbm_to_vmem [thread:$0]  %s263, 256, %s265, [#allocation3], 128, 128, 8
        $region16: #{tpu_custom_call.1} parent=11 // pred_fallthru
          _
        // Predicated region
        $region17: #{tpu_custom_call.1} parent=11 // pred_check
          %p271 = pneg %p153
        $region18: #{tpu_custom_call.1} parent=11 // pred_check_branch
          %273 = sbr.rel (%p271) target = $region20
        $region19: #{tpu_custom_call.1} parent=11 // pred_region
          _
        $region20: #{tpu_custom_call.1} parent=11 // pred_fallthru
          _
        // Predicated region
        $region21: #{tpu_custom_call.1} parent=11 // pred_check
          %p274 = pneg %p174
        $region22: #{tpu_custom_call.1} parent=11 // pred_check_branch
          %276 = sbr.rel (%p274) target = $region24
        $region23: #{tpu_custom_call.1} parent=11 // pred_region
          _
        $region24: #{tpu_custom_call.1} parent=11 // pred_fallthru
          _
        // Predicated region
        $region25: #{tpu_custom_call.1} parent=11 // pred_check
          %p277 = pneg %p195
        $region26: #{tpu_custom_call.1} parent=11 // pred_check_branch
          %279 = sbr.rel (%p277) target = $region28
        $region27: #{tpu_custom_call.1} parent=11 // pred_region
          _
        $region28: #{tpu_custom_call.1} parent=11 // pred_fallthru
          _
        // Predicated region
        $region29: #{tpu_custom_call.1} parent=11 // pred_check
          %p280 = pneg %p216
        $region30: #{tpu_custom_call.1} parent=11 // pred_check_branch
          %282 = sbr.rel (%p280) target = $region32
        $region31: #{tpu_custom_call.1} parent=11 // pred_region
          _
        $region32: #{tpu_custom_call.1} parent=11 // pred_fallthru
          _
      $region12: #{tpu_custom_call.1} parent=5 // pred_fallthru
        _
      %p283 = scmp.lt.s32.totalorder %s21, 4
      // Predicated region
      $region33: #{tpu_custom_call.1} parent=5 // pred_check
        %p284 = pneg %p283
      $region34: #{tpu_custom_call.1} parent=5 // pred_check_branch
        %286 = sbr.rel (%p284) target = $region36
      $region35: #{tpu_custom_call.1} parent=5 // pred_region
        // Predicated region
        $region37: #{tpu_custom_call.1} parent=35 // pred_check
          %p287 = pneg %p53
        $region38: #{tpu_custom_call.1} parent=35 // pred_check_branch
          %289 = sbr.rel (%p287) target = $region40
        $region39: #{tpu_custom_call.1} parent=35 // pred_region
          %s290 = smul.u32 16, %s29
          %p291 = scmp.lt.s32.totalorder %s290, 31
          %s292 = scalar_select %p291, %s290, 31
          %s293 = smul.addr %s292, 8
          %s294 = scalar_lea.vmem %s0, %s293
          %s295 = smul.u32 16, %s29
        $region40: #{tpu_custom_call.1} parent=35 // pred_fallthru
          _
        // Predicated region
        $region41: #{tpu_custom_call.1} parent=35 // pred_check
          %p296 = pneg %p79
        $region42: #{tpu_custom_call.1} parent=35 // pred_check_branch
          %298 = sbr.rel (%p296) target = $region44
        $region43: #{tpu_custom_call.1} parent=35 // pred_region
          %p299 = scmp.lt.s32.totalorder %s29, 1
          %s300 = scalar_select %p299, %s29, 1
          %s301 = scalar_lea.vmem %s1, %s300
        $region44: #{tpu_custom_call.1} parent=35 // pred_fallthru
          _
        // Predicated region
        $region45: #{tpu_custom_call.1} parent=35 // pred_check
          %p302 = pneg %p126
        $region46: #{tpu_custom_call.1} parent=35 // pred_check_branch
          %304 = sbr.rel (%p302) target = $region48
        $region47: #{tpu_custom_call.1} parent=35 // pred_region
          %s305 = sand.u32 %s116, 1
          %s306 = scalar_lea.sflag [#allocation6], %s305
          %s307 = sand.u32 %s116, 1
          %s308 = smul.addr %s307, 8
          %s309 = scalar_lea.vmem [#allocation5], %s308
          %311 = vsyncadd %s306, 0
          %s312 = smul.addr %s28, 8
          %s313 = scalar_lea.hbm %s3, %s312
          %s315 = sshll.u32 %s313, 4
          %s316 = int_to_ptr.hbm [resolvable:$true] %s315
          %s317 = sshll.u32 %s309, 4
          %s318 = int_to_ptr.vmem [resolvable:$true] %s317
          %320 = dma.hbm_to_vmem [thread:$0]  %s316, 128, %s318, %s306
        $region48: #{tpu_custom_call.1} parent=35 // pred_fallthru
          _
      $region36: #{tpu_custom_call.1} parent=5 // pred_fallthru
        _
      %p321 = scmp.le.s32.totalorder 1, %s21
      %p322 = scmp.lt.s32.totalorder %s21, 5
      %p323 = pnand %p321, %p322
      %p324 = pneg %p323
      // Predicated region
      $region49: #{tpu_custom_call.1} parent=5 // pred_check
        _
      $region50: #{tpu_custom_call.1} parent=5 // pred_check_branch
        %326 = sbr.rel (%p323) target = $region52
      $region51: #{tpu_custom_call.1} parent=5 // pred_region
        %s327 = ssub.s32 %s21, 1
        // Predicated region
        $region53: #{tpu_custom_call.1} parent=51 // pred_check
          %p328 = pneg %p106
        $region54: #{tpu_custom_call.1} parent=51 // pred_check_branch
          %330 = sbr.rel (%p328) target = $region56
        $region55: #{tpu_custom_call.1} parent=51 // pred_region
          %332 = dma.done [#allocation3], 256
        $region56: #{tpu_custom_call.1} parent=51 // pred_fallthru
          _
        %s333 = sand.u32 %s119, 1
        %s334 = scalar_lea.sflag [#allocation6], %s333
        %s335 = sand.u32 %s119, 1
        %s336 = smul.addr %s335, 8
        %s337 = scalar_lea.vmem [#allocation5], %s336
        // Predicated region
        $region57: #{tpu_custom_call.1} parent=51 // pred_check
          %p338 = pneg %p132
        $region58: #{tpu_custom_call.1} parent=51 // pred_check_branch
          %340 = sbr.rel (%p338) target = $region60
        $region59: #{tpu_custom_call.1} parent=51 // pred_region
          %342 = dma.done %s334, 128
        $region60: #{tpu_custom_call.1} parent=51 // pred_fallthru
          _
        %s343 = smul.u32 16, %s31
        %p344 = scmp.lt.s32.totalorder %s343, 31
        %s345 = scalar_select %p344, %s343, 31
        %s346 = smul.addr %s345, 8
        %s347 = scalar_lea.vmem %s0, %s346
        %p348 = pneg %p59
        %p349 = pneg %p56
        %p350 = scmp.lt.s32.totalorder %s31, 1
        %s351 = scalar_select %p350, %s31, 1
        %s352 = scalar_lea.vmem %s1, %s351
        %p353 = pneg %p85
        %p354 = pneg %p82
        %p355 = pneg %p106
        %p356 = pneg %p103
        %s357 = sand.u32 %s119, 1
        %s358 = scalar_lea.sflag [#allocation6], %s357
        %s359 = sand.u32 %s119, 1
        %s360 = smul.addr %s359, 8
        %s361 = scalar_lea.vmem [#allocation5], %s360
        %p362 = pneg %p132
        %p363 = pneg %p129
        %p364 = pneg %p153
        %p365 = pneg %p150
        %p366 = pneg %p174
        %p367 = pneg %p171
        %p368 = pneg %p195
        %p369 = pneg %p192
        %p370 = pneg %p216
        %p371 = pneg %p213
        %p372 = pneg %p242
        %p373 = pneg %p239
        %s374 = sand.u32 %s229, 1
        %s375 = scalar_lea.sflag [#allocation4], %s374
        %s376 = sand.u32 %s229, 1
        %s377 = smul.addr %s376, 8
        %s378 = scalar_lea.vmem [#allocation7], %s377
        %s379 = smul.u32 16, %s31
        %p380 = scmp.lt.s32.totalorder %s379, 31
        %s381 = scalar_select %p380, %s379, 31
        %s382 = smul.addr %s381, 8
        %s383 = scalar_lea.vmem %s0, %s382
        %s384 = smul.u32 16, %s31
        %p385 = scmp.lt.s32.totalorder %s31, 1
        %s386 = scalar_select %p385, %s31, 1
        %s387 = scalar_lea.vmem %s1, %s386
        %p388 = scmp.eq.s32.totalorder %s31, 0
        // Predicated region
        $region61: #{tpu_custom_call.1} parent=51 // pred_check
          %p389 = pneg %p388
        $region62: #{tpu_custom_call.1} parent=51 // pred_check_branch
          %391 = sbr.rel (%p389) target = $region64
        $region63: #{tpu_custom_call.1} parent=51 // pred_region
          %392 = vst [vmem:[%s378] sm:$0xff] 0.0
        $region64: #{tpu_custom_call.1} parent=51 // pred_fallthru
          _
        %v393 = vld [vmem:[%s383] sm:$0xff]
        %v394 = vld [vmem:[%s383 + $0x8] sm:$0xff]
        %v395 = vld [vmem:[%s383 + $0x10] sm:$0xff]
        %v396 = vld [vmem:[%s383 + $0x18] sm:$0xff]
        %v397 = vld [vmem:[%s383 + $0x20] sm:$0xff]
        %v398 = vld [vmem:[%s383 + $0x28] sm:$0xff]
        %v399 = vld [vmem:[%s383 + $0x30] sm:$0xff]
        %v400 = vld [vmem:[%s383 + $0x38] sm:$0xff]
        %v401 = vld [vmem:[%s383 + $0x40] sm:$0xff]
        %v402 = vld [vmem:[%s383 + $0x48] sm:$0xff]
        %v403 = vld [vmem:[%s383 + $0x50] sm:$0xff]
        %v404 = vld [vmem:[%s383 + $0x58] sm:$0xff]
        %v405 = vld [vmem:[%s383 + $0x60] sm:$0xff]
        %v406 = vld [vmem:[%s383 + $0x68] sm:$0xff]
        %v407 = vld [vmem:[%s383 + $0x70] sm:$0xff]
        %v408 = vld [vmem:[%s383 + $0x78] sm:$0xff]
        %v409 = vlaneseq
        %v410 = vand.u32 %v409, 127
        %411 = vset.pattern.permute.xlu0 0
        %412 = vperm.xlu0 %411, %v393
        %v413 = vpop.permute.xlu0 %412
        %414 = vset.pattern.permute.xlu0 0
        %415 = vperm.xlu0 %414, %v394
        %v416 = vpop.permute.xlu0 %415
        %417 = vset.pattern.permute.xlu0 0
        %418 = vperm.xlu0 %417, %v395
        %v419 = vpop.permute.xlu0 %418
        %420 = vset.pattern.permute.xlu0 0
        %421 = vperm.xlu0 %420, %v396
        %v422 = vpop.permute.xlu0 %421
        %423 = vset.pattern.permute.xlu0 0
        %424 = vperm.xlu0 %423, %v397
        %v425 = vpop.permute.xlu0 %424
        %426 = vset.pattern.permute.xlu0 0
        %427 = vperm.xlu0 %426, %v398
        %v428 = vpop.permute.xlu0 %427
        %429 = vset.pattern.permute.xlu0 0
        %430 = vperm.xlu0 %429, %v399
        %v431 = vpop.permute.xlu0 %430
        %432 = vset.pattern.permute.xlu0 0
        %433 = vperm.xlu0 %432, %v400
        %v434 = vpop.permute.xlu0 %433
        %435 = vset.pattern.permute.xlu0 0
        %436 = vperm.xlu0 %435, %v401
        %v437 = vpop.permute.xlu0 %436
        %438 = vset.pattern.permute.xlu0 0
        %439 = vperm.xlu0 %438, %v402
        %v440 = vpop.permute.xlu0 %439
        %441 = vset.pattern.permute.xlu0 0
        %442 = vperm.xlu0 %441, %v403
        %v443 = vpop.permute.xlu0 %442
        %444 = vset.pattern.permute.xlu0 0
        %445 = vperm.xlu0 %444, %v404
        %v446 = vpop.permute.xlu0 %445
        %447 = vset.pattern.permute.xlu0 0
        %448 = vperm.xlu0 %447, %v405
        %v449 = vpop.permute.xlu0 %448
        %450 = vset.pattern.permute.xlu0 0
        %451 = vperm.xlu0 %450, %v406
        %v452 = vpop.permute.xlu0 %451
        %453 = vset.pattern.permute.xlu0 0
        %454 = vperm.xlu0 %453, %v407
        %v455 = vpop.permute.xlu0 %454
        %456 = vset.pattern.permute.xlu0 0
        %457 = vperm.xlu0 %456, %v408
        %v458 = vpop.permute.xlu0 %457
        %vm459 = vcmp.eq.s32.totalorder %v410, %v413
        %vm460 = vcmp.eq.s32.totalorder %v410, %v416
        %vm461 = vcmp.eq.s32.totalorder %v410, %v419
        %vm462 = vcmp.eq.s32.totalorder %v410, %v422
        %vm463 = vcmp.eq.s32.totalorder %v410, %v425
        %vm464 = vcmp.eq.s32.totalorder %v410, %v428
        %vm465 = vcmp.eq.s32.totalorder %v410, %v431
        %vm466 = vcmp.eq.s32.totalorder %v410, %v434
        %vm467 = vcmp.eq.s32.totalorder %v410, %v437
        %vm468 = vcmp.eq.s32.totalorder %v410, %v440
        %vm469 = vcmp.eq.s32.totalorder %v410, %v443
        %vm470 = vcmp.eq.s32.totalorder %v410, %v446
        %vm471 = vcmp.eq.s32.totalorder %v410, %v449
        %vm472 = vcmp.eq.s32.totalorder %v410, %v452
        %vm473 = vcmp.eq.s32.totalorder %v410, %v455
        %vm474 = vcmp.eq.s32.totalorder %v410, %v458
        %v475 = vsel %vm459, 1, 0
        %v476 = vsel %vm460, 1, 0
        %v477 = vsel %vm461, 1, 0
        %v478 = vsel %vm462, 1, 0
        %v479 = vsel %vm463, 1, 0
        %v480 = vsel %vm464, 1, 0
        %v481 = vsel %vm465, 1, 0
        %v482 = vsel %vm466, 1, 0
        %v483 = vsel %vm467, 1, 0
        %v484 = vsel %vm468, 1, 0
        %v485 = vsel %vm469, 1, 0
        %v486 = vsel %vm470, 1, 0
        %v487 = vsel %vm471, 1, 0
        %v488 = vsel %vm472, 1, 0
        %v489 = vsel %vm473, 1, 0
        %v490 = vsel %vm474, 1, 0
        %v491 = vcvt.s32.f32 %v475
        %v492 = vcvt.s32.f32 %v476
        %v493 = vcvt.s32.f32 %v477
        %v494 = vcvt.s32.f32 %v478
        %v495 = vcvt.s32.f32 %v479
        %v496 = vcvt.s32.f32 %v480
        %v497 = vcvt.s32.f32 %v481
        %v498 = vcvt.s32.f32 %v482
        %v499 = vcvt.s32.f32 %v483
        %v500 = vcvt.s32.f32 %v484
        %v501 = vcvt.s32.f32 %v485
        %v502 = vcvt.s32.f32 %v486
        %v503 = vcvt.s32.f32 %v487
        %v504 = vcvt.s32.f32 %v488
        %v505 = vcvt.s32.f32 %v489
        %v506 = vcvt.s32.f32 %v490
        %v507 = vld [vmem:[#allocation2] sm:$0xff]
        %v508 = vld [vmem:[#allocation2 + $0x8] sm:$0xff]
        %vm509 = vcmask 130048
        %v511 = vsel %vm509, %v491, 0
        %v514 = vsel %vm509, %v492, 0
        %v517 = vsel %vm509, %v493, 0
        %v520 = vsel %vm509, %v494, 0
        %v523 = vsel %vm509, %v495, 0
        %v526 = vsel %vm509, %v496, 0
        %v529 = vsel %vm509, %v497, 0
        %v532 = vsel %vm509, %v498, 0
        %v535 = vsel %vm509, %v499, 0
        %v538 = vsel %vm509, %v500, 0
        %v541 = vsel %vm509, %v501, 0
        %v544 = vsel %vm509, %v502, 0
        %v547 = vsel %vm509, %v503, 0
        %v550 = vsel %vm509, %v504, 0
        %v553 = vsel %vm509, %v505, 0
        %v556 = vsel %vm509, %v506, 0
        %558 = vmatpush.msra.mxu0 0.0
        %559 = vmatpush.msra.mxu0 0.0
        %560 = vmatpush.msra.mxu0 0.0
        %561 = vmatpush.msra.mxu0 0.0
        %562 = vmatpush.msra.mxu0 0.0
        %563 = vmatpush.msra.mxu0 0.0
        %564 = vmatpush.msra.mxu0 0.0
        %565 = vmatpush.msra.mxu0 0.0
        %566 = vmatpush.msra.mxu0 0.0
        %567 = vmatpush.msra.mxu0 0.0
        %568 = vmatpush.msra.mxu0 0.0
        %569 = vmatpush.msra.mxu0 0.0
        %570 = vmatpush.msra.mxu0 0.0
        %571 = vmatpush.msra.mxu0 0.0
        %572 = vmatpush.msra.mxu0 %v508
        %573 = vmatpush.msra.mxu0 %v507
        %574 = vmatmul.f32.gmra.mxu0 %v511
        %v575 = vpop.f32.mrf.mxu0
        %v576 = vadd.f32 0.0, %v575
        %577 = vmatmul.f32.gmra.mxu0 %v514
        %v578 = vpop.f32.mrf.mxu0
        %v579 = vadd.f32 0.0, %v578
        %580 = vmatmul.f32.gmra.mxu0 %v517
        %v581 = vpop.f32.mrf.mxu0
        %v582 = vadd.f32 0.0, %v581
        %583 = vmatmul.f32.gmra.mxu0 %v520
        %v584 = vpop.f32.mrf.mxu0
        %v585 = vadd.f32 0.0, %v584
        %586 = vmatmul.f32.gmra.mxu0 %v523
        %v587 = vpop.f32.mrf.mxu0
        %v588 = vadd.f32 0.0, %v587
        %589 = vmatmul.f32.gmra.mxu0 %v526
        %v590 = vpop.f32.mrf.mxu0
        %v591 = vadd.f32 0.0, %v590
        %592 = vmatmul.f32.gmra.mxu0 %v529
        %v593 = vpop.f32.mrf.mxu0
        %v594 = vadd.f32 0.0, %v593
        %595 = vmatmul.f32.gmra.mxu0 %v532
        %v596 = vpop.f32.mrf.mxu0
        %v597 = vadd.f32 0.0, %v596
        %598 = vmatmul.f32.gmra.mxu0 %v535
        %v599 = vpop.f32.mrf.mxu0
        %v600 = vadd.f32 0.0, %v599
        %601 = vmatmul.f32.gmra.mxu0 %v538
        %v602 = vpop.f32.mrf.mxu0
        %v603 = vadd.f32 0.0, %v602
        %604 = vmatmul.f32.gmra.mxu0 %v541
        %v605 = vpop.f32.mrf.mxu0
        %v606 = vadd.f32 0.0, %v605
        %607 = vmatmul.f32.gmra.mxu0 %v544
        %v608 = vpop.f32.mrf.mxu0
        %v609 = vadd.f32 0.0, %v608
        %610 = vmatmul.f32.gmra.mxu0 %v547
        %v611 = vpop.f32.mrf.mxu0
        %v612 = vadd.f32 0.0, %v611
        %613 = vmatmul.f32.gmra.mxu0 %v550
        %v614 = vpop.f32.mrf.mxu0
        %v615 = vadd.f32 0.0, %v614
        %616 = vmatmul.f32.gmra.mxu0 %v553
        %v617 = vpop.f32.mrf.mxu0
        %v618 = vadd.f32 0.0, %v617
        %619 = vmatmul.f32.gmra.mxu0 %v556
        %v620 = vpop.f32.mrf.mxu0
        %v621 = vadd.f32 0.0, %v620
        %622 = vdwg.mxu0
        %v623 = vld [vmem:[%s387] sm:$0x1]
        %v624 = vlaneseq
        %v625 = vshrl.u32 %v624, 7
        %s626 = smul.u32 %s30, 8
        %v627 = vstv %s626
        %v628 = vadd.s32 %v625, %v627
        %v629 = vperm.slane %v623, 0
        %vm630 = vcmp.eq.s32.totalorder %v628, %v629
        %v631 = vsel %vm630, 1, 0
        %v632 = vcvt.s32.f32 %v631
        %v633 = vld [vmem:[%s378] sm:$0xff]
        %634 = vmatpush.msra.mxu0 %v621
        %635 = vmatpush.msra.mxu0 %v618
        %636 = vmatpush.msra.mxu0 %v615
        %637 = vmatpush.msra.mxu0 %v612
        %638 = vmatpush.msra.mxu0 %v609
        %639 = vmatpush.msra.mxu0 %v606
        %640 = vmatpush.msra.mxu0 %v603
        %641 = vmatpush.msra.mxu0 %v600
        %642 = vmatpush.msra.mxu0 %v597
        %643 = vmatpush.msra.mxu0 %v594
        %644 = vmatpush.msra.mxu0 %v591
        %645 = vmatpush.msra.mxu0 %v588
        %646 = vmatpush.msra.mxu0 %v585
        %647 = vmatpush.msra.mxu0 %v582
        %648 = vmatpush.msra.mxu0 %v579
        %649 = vmatpush.msra.mxu0 %v576
        %650 = vmatmul.f32.gmra.mxu0 %v632
        %v651 = vpop.f32.mrf.mxu0
        %v652 = vadd.f32 0.0, %v651
        %653 = vdwg.mxu0
        %v654 = vadd.f32 %v633, %v652
        %655 = vst [vmem:[%s378] sm:$0xff] %v654
        %p656 = scmp.eq.s32.totalorder %s31, 1
        // Predicated region
        $region65: #{tpu_custom_call.1} parent=51 // pred_check
          %p657 = pneg %p656
        $region66: #{tpu_custom_call.1} parent=51 // pred_check_branch
          %659 = sbr.rel (%p657) target = $region68
        $region67: #{tpu_custom_call.1} parent=51 // pred_region
          %v660 = vld [vmem:[%s337] sm:$0xff]
          %v661 = vld [vmem:[%s378] sm:$0xff]
          %v662 = vadd.f32 %v660, %v661
          %v663 = vld [vmem:[%s4] sm:$0xff]
          %v664 = vld [vmem:[%s4 + $0x8] sm:$0xff]
          %v665 = vld [vmem:[%s4 + $0x10] sm:$0xff]
          %v666 = vld [vmem:[%s4 + $0x18] sm:$0xff]
          %v667 = vld [vmem:[%s4 + $0x20] sm:$0xff]
          %v668 = vld [vmem:[%s4 + $0x28] sm:$0xff]
          %v669 = vld [vmem:[%s4 + $0x30] sm:$0xff]
          %v670 = vld [vmem:[%s4 + $0x38] sm:$0xff]
          %v671 = vld [vmem:[%s4 + $0x40] sm:$0xff]
          %v672 = vld [vmem:[%s4 + $0x48] sm:$0xff]
          %v673 = vld [vmem:[%s4 + $0x50] sm:$0xff]
          %v674 = vld [vmem:[%s4 + $0x58] sm:$0xff]
          %v675 = vld [vmem:[%s4 + $0x60] sm:$0xff]
          %v676 = vld [vmem:[%s4 + $0x68] sm:$0xff]
          %v677 = vld [vmem:[%s4 + $0x70] sm:$0xff]
          %v678 = vld [vmem:[%s4 + $0x78] sm:$0xff]
          %v679 = vld [vmem:[%s5] sm:$0x1]
          %v681 = vperm.slane %v679, 0
          %683 = vmatpush.msra.mxu0 %v678
          %684 = vmatpush.msra.mxu0 %v677
          %685 = vmatpush.msra.mxu0 %v676
          %686 = vmatpush.msra.mxu0 %v675
          %687 = vmatpush.msra.mxu0 %v674
          %688 = vmatpush.msra.mxu0 %v673
          %689 = vmatpush.msra.mxu0 %v672
          %690 = vmatpush.msra.mxu0 %v671
          %691 = vmatpush.msra.mxu0 %v670
          %692 = vmatpush.msra.mxu0 %v669
          %693 = vmatpush.msra.mxu0 %v668
          %694 = vmatpush.msra.mxu0 %v667
          %695 = vmatpush.msra.mxu0 %v666
          %696 = vmatpush.msra.mxu0 %v665
          %697 = vmatpush.msra.mxu0 %v664
          %698 = vmatpush.msra.mxu0 %v663
          %699 = vmatmul.f32.gmra.mxu0 %v662
          %v700 = vpop.f32.mrf.mxu0
          %v701 = vadd.f32 %v681, %v700
          %702 = vdwg.mxu0
          %v703 = vmax.f32 %v701, 0.0
          %v704 = vld [vmem:[%s6] sm:$0xff]
          %v705 = vld [vmem:[%s6 + $0x8] sm:$0xff]
          %v706 = vld [vmem:[%s6 + $0x10] sm:$0xff]
          %v707 = vld [vmem:[%s6 + $0x18] sm:$0xff]
          %v708 = vld [vmem:[%s6 + $0x20] sm:$0xff]
          %v709 = vld [vmem:[%s6 + $0x28] sm:$0xff]
          %v710 = vld [vmem:[%s6 + $0x30] sm:$0xff]
          %v711 = vld [vmem:[%s6 + $0x38] sm:$0xff]
          %v712 = vld [vmem:[%s6 + $0x40] sm:$0xff]
          %v713 = vld [vmem:[%s6 + $0x48] sm:$0xff]
          %v714 = vld [vmem:[%s6 + $0x50] sm:$0xff]
          %v715 = vld [vmem:[%s6 + $0x58] sm:$0xff]
          %v716 = vld [vmem:[%s6 + $0x60] sm:$0xff]
          %v717 = vld [vmem:[%s6 + $0x68] sm:$0xff]
          %v718 = vld [vmem:[%s6 + $0x70] sm:$0xff]
          %v719 = vld [vmem:[%s6 + $0x78] sm:$0xff]
          %v720 = vld [vmem:[%s7] sm:$0x1]
          %v722 = vperm.slane %v720, 0
          %724 = vmatpush.msra.mxu0 %v719
          %725 = vmatpush.msra.mxu0 %v718
          %726 = vmatpush.msra.mxu0 %v717
          %727 = vmatpush.msra.mxu0 %v716
          %728 = vmatpush.msra.mxu0 %v715
          %729 = vmatpush.msra.mxu0 %v714
          %730 = vmatpush.msra.mxu0 %v713
          %731 = vmatpush.msra.mxu0 %v712
          %732 = vmatpush.msra.mxu0 %v711
          %733 = vmatpush.msra.mxu0 %v710
          %734 = vmatpush.msra.mxu0 %v709
          %735 = vmatpush.msra.mxu0 %v708
          %736 = vmatpush.msra.mxu0 %v707
          %737 = vmatpush.msra.mxu0 %v706
          %738 = vmatpush.msra.mxu0 %v705
          %739 = vmatpush.msra.mxu0 %v704
          %740 = vmatmul.f32.gmra.mxu0 %v703
          %v741 = vpop.f32.mrf.mxu0
          %v742 = vadd.f32 %v722, %v741
          %743 = vdwg.mxu0
          %744 = vst [vmem:[%s378] sm:$0xff] %v742
        $region68: #{tpu_custom_call.1} parent=51 // pred_fallthru
          _
        %s745 = sand.u32 %s229, 1
        %s746 = scalar_lea.sflag [#allocation4], %s745
        %s747 = sand.u32 %s229, 1
        %s748 = smul.addr %s747, 8
        %s749 = scalar_lea.vmem [#allocation7], %s748
        // Predicated region
        $region69: #{tpu_custom_call.1} parent=51 // pred_check
          %p750 = pneg %p239
        $region70: #{tpu_custom_call.1} parent=51 // pred_check_branch
          %752 = sbr.rel (%p750) target = $region72
        $region71: #{tpu_custom_call.1} parent=51 // pred_region
          %754 = vsyncadd %s746, 0
          %s755 = smul.addr %s30, 8
          %s756 = scalar_lea.hbm %s8, %s755
          %s758 = sshll.u32 %s749, 4
          %s759 = int_to_ptr.vmem [resolvable:$true] %s758
          %s760 = sshll.u32 %s756, 4
          %s761 = int_to_ptr.hbm [resolvable:$true] %s760
          %763 = dma.vmem_to_hbm [thread:$0]  %s759, 128, %s761, %s746
        $region72: #{tpu_custom_call.1} parent=51 // pred_fallthru
          _
      $region52: #{tpu_custom_call.1} parent=5 // pred_fallthru
        _
      %p764 = scmp.le.s32.totalorder 2, %s21
      // Predicated region
      $region73: #{tpu_custom_call.1} parent=5 // pred_check
        %p765 = pneg %p764
      $region74: #{tpu_custom_call.1} parent=5 // pred_check_branch
        %767 = sbr.rel (%p765) target = $region76
      $region75: #{tpu_custom_call.1} parent=5 // pred_region
        %s768 = ssub.s32 %s21, 2
        // Predicated region
        $region77: #{tpu_custom_call.1} parent=75 // pred_check
          %p769 = pneg %p245
        $region78: #{tpu_custom_call.1} parent=75 // pred_check_branch
          %771 = sbr.rel (%p769) target = $region80
        $region79: #{tpu_custom_call.1} parent=75 // pred_region
          %s772 = sand.u32 %s230, 1
          %s773 = scalar_lea.sflag [#allocation4], %s772
          %s774 = sand.u32 %s230, 1
          %s775 = smul.addr %s774, 8
          %s776 = scalar_lea.vmem [#allocation7], %s775
          %778 = dma.done %s773, 128
        $region80: #{tpu_custom_call.1} parent=75 // pred_fallthru
          _
      $region76: #{tpu_custom_call.1} parent=5 // pred_fallthru
        _
    $region6: #{tpu_custom_call.1} parent=1 // loop_footer
      %s25 = sadd.s32 1, %s21
    $region7: #{tpu_custom_call.1} parent=1 // loop_footer_branch
      %20 = sbr.rel target = $region3
    $region8: #{tpu_custom_call.1} parent=1 // loop_exit
      _
    %779 = vsyncpa [#allocation3], 1
    %s780 = scalar_lea.sflag [#allocation3], 1
    %781 = vsyncpa %s780, 1
    %782 = vsyncpa [#allocation6], 1
    %s783 = scalar_lea.sflag [#allocation6], 1
    %784 = vsyncpa %s783, 1
    %785 = vsyncpa [#allocation4], 1
    %s786 = scalar_lea.sflag [#allocation4], 1
    %787 = vsyncpa %s786, 1

</llo_original>
